<compile_context>
chip_gen: v7x
topology: tpu7x:2x2x1
jax: 0.10.0
libtpu: 0.0.40
codegen_flags: <defaults>
</compile_context>

<pallas_src>
import jax
import jax.numpy as jnp
from jax.experimental import pallas as pl
from jax.experimental.pallas import tpu as pltpu


def _add_one_kernel(x_ref, o_ref):
    # Elementwise hot path: whole VMEM tile in one VPU add.
    o_ref[...] = x_ref[...] + 1.0


# ~2 MiB per tile => 2 (in+out) * 2 (double buffer) * 2 MiB = 8 MiB scoped VMEM.
_TILE_BYTES = 2 * 1024 * 1024


def add_one(x: jax.Array) -> jax.Array:
    """y = x + 1 via a tiled Pallas TPU kernel. Works for any shape (f32 path tested)."""
    orig_shape = x.shape
    orig_dtype = x.dtype
    total = x.size

    # Pick the widest lane-dense layout that divides the element count so the
    # reshape is zero-copy (metadata only).
    lanes = None
    for cand in (1024, 512, 256, 128):
        if total % cand == 0:
            lanes = cand
            break

    pad = 0
    if lanes is None:
        # Rare ragged-tail case: pad the flattened array to a multiple of 128.
        # TODO(synk): handle the tail with a masked store on the last grid step
        # instead of a host-side pad, if ragged sizes ever matter.
        lanes = 128
        pad = (-total) % lanes
        x_flat = jnp.pad(jnp.ravel(x), (0, pad))
        x2d = x_flat.reshape(-1, lanes)
    else:
        x2d = x.reshape(total // lanes, lanes)

    rows = x2d.shape[0]

    # Row-tile sized to ~_TILE_BYTES, rounded down to a multiple of 8 sublanes.
    itemsize = jnp.dtype(orig_dtype).itemsize
    tile_r = (_TILE_BYTES // (lanes * itemsize)) // 8 * 8
    tile_r = max(8, tile_r)
    if tile_r >= rows:
        # Single block covering the full array (satisfies the (8,128) rule by
        # matching the full array dims exactly).
        tile_r = rows

    grid = (pl.cdiv(rows, tile_r),)

    out2d = pl.pallas_call(
        _add_one_kernel,
        out_shape=jax.ShapeDtypeStruct((rows, lanes), orig_dtype),
        grid=grid,
        in_specs=[pl.BlockSpec((tile_r, lanes), lambda i: (i, 0))],
        out_specs=pl.BlockSpec((tile_r, lanes), lambda i: (i, 0)),
        compiler_params=pltpu.CompilerParams(
            dimension_semantics=("parallel",),
        ),
    )(x2d)

    if pad:
        out = out2d.reshape(-1)[:total]
        return out.reshape(orig_shape)
    return out2d.reshape(orig_shape)


if __name__ == "__main__":
    key = jax.random.PRNGKey(0)
    # Small NCHW-shaped input consistent with a generic forward pass.
    x = jax.random.normal(key, (2, 4, 16, 16), dtype=jnp.float32)

    y = add_one(x)
    jax.block_until_ready(y)

    # Correctness check against the reference semantics (x + 1).
    expected = x + 1.0
    assert y.shape == expected.shape, "shape mismatch vs reference"
    assert jnp.allclose(y, expected, atol=1e-6), "mismatch vs reference"

    print("KERNEL_OK")
</pallas_src>

<mosaic_0001>
module attributes {stable_mosaic.version = 11 : i64} {
  func.func @_add_one_kernel(%arg0: i32, %arg1: memref<2x1024xf32, #tpu.memory_space<vmem>>, %arg2: memref<2x1024xf32, #tpu.memory_space<vmem>>) attributes {dimension_semantics = [#tpu.dimension_semantics<parallel>], iteration_bounds = array<i64: 1>, scalar_prefetch = 0 : i64, scratch_operands = 0 : i64, tpu.core_type = #tpu.core_type<tc>, window_params = [{transform_indices = @transform_0, window_bounds = array<i64: 2, 1024>}, {transform_indices = @transform_1, window_bounds = array<i64: 2, 1024>}]} {
    %c0 = arith.constant 0 : index
    %c0_0 = arith.constant 0 : index
    %0 = vector.load %arg1[%c0, %c0_0] : memref<2x1024xf32, #tpu.memory_space<vmem>>, vector<2x1024xf32>
    %cst = arith.constant 1.000000e+00 : f32
    %1 = vector.broadcast %cst : f32 to vector<2x1024xf32>
    %2 = arith.addf %0, %1 : vector<2x1024xf32>
    %c0_1 = arith.constant 0 : index
    %c0_2 = arith.constant 0 : index
    %3 = vector.load %arg2[%c0_1, %c0_2] : memref<2x1024xf32, #tpu.memory_space<vmem>>, vector<2x1024xf32>
    tpu.vector_store %arg2[%c0_1, %c0_2], %2 {strides = array<i32>} : memref<2x1024xf32, #tpu.memory_space<vmem>>, vector<2x1024xf32>,
    return
  }
  func.func @transform_0(%arg0: i32) -> (i32, i32) {
    %c0_i32 = arith.constant 0 : i32
    %c0_i32_0 = arith.constant 0 : i32
    return %arg0, %c0_i32 : i32, i32
  }
  func.func @transform_1(%arg0: i32) -> (i32, i32) {
    %c0_i32 = arith.constant 0 : i32
    %c0_i32_0 = arith.constant 0 : i32
    return %arg0, %c0_i32 : i32, i32
  }
}

</mosaic_0001>

<llo_original>
// kernel: tpu_custom_call.1
$region0: #{tpu_custom_call.1}
  #allocation0 [shape = 'u32[]', space=smem, size = 0x4, offset = 0x4, fixed_abs, tag = 'smem constant byte address 0x4 - core index']
  #allocation1 [shape = 'u32[144,128]{1,0:T(1,128)}', space=vmem, size = 0x12000, scoped, tag = 'internal scratch']
  %s0 = inlined_call_operand.hbm [shape: f32[2,1024], index: 0, kind: input, shape index: {}]
  %s1 = inlined_call_operand.hbm [shape: f32[2,1024], index: 1, kind: output, shape index: {}]
  %s2 = sld [smem:[#allocation0]]
  $region18: #{tpu_custom_call.1} parent=0
    _
  %s4 = ssub.s32 1, %s2
  %s5 = scalar_select 0, %s4, %s2
  $region1: #{tpu_custom_call.1} parent=0
    #allocation2 [shape = 'u8[8192]{0}', space=vmem, size = 0x2000, scoped, tag = 'input window, operand 0, single buffered']
    #allocation3 [shape = 's32[1]{0}', space=sflag, size = 0x4, scoped, tag = 'scoped memory for tpu_custom_call.1']
    #allocation4 [shape = 's32[1]{0}', space=sflag, size = 0x4, scoped, tag = 'scoped memory for tpu_custom_call.1']
    #allocation5 [shape = 'u8[8192]{0}', space=vmem, size = 0x2000, scoped, tag = 'output window, operand 0, single buffered']
    %6 = vsyncpa [#allocation3], 0
    %7 = vsyncpa [#allocation4], 0
    // Predicated region
    $region2: #{tpu_custom_call.1} parent=1 // pred_check
      _
    $region3: #{tpu_custom_call.1} parent=1 // pred_check_branch
      %9 = sbr.rel (0) target = $region5
    $region4: #{tpu_custom_call.1} parent=1 // pred_region
      %s11 = ssub.s32 256, 256
      %12 = vsyncadd [#allocation3], %s11
      %s14 = sshll.u32 [#allocation2], 4
      %s15 = int_to_ptr.vmem [resolvable:$true] %s14
      %17 = dma.hbm_to_vmem [thread:$0]  %s0, 256, %s15, [#allocation3]
    $region5: #{tpu_custom_call.1} parent=1 // pred_fallthru
      _
    // Predicated region
    $region6: #{tpu_custom_call.1} parent=1 // pred_check
      _
    $region7: #{tpu_custom_call.1} parent=1 // pred_check_branch
      %19 = sbr.rel (0) target = $region9
    $region8: #{tpu_custom_call.1} parent=1 // pred_region
      %20 = dma.done [#allocation3], 256
    $region9: #{tpu_custom_call.1} parent=1 // pred_fallthru
      _
    %v21 = vld [vmem:[#allocation2] sm:$0xff]
    %v22 = vld [vmem:[#allocation2 + $0x8] sm:$0xff]
    %v23 = vadd.f32 %v21, 1.0
    %v24 = vadd.f32 %v22, 1.0
    %25 = vst [vmem:[#allocation5] sm:$0xff] %v23
    %26 = vst [vmem:[#allocation5 + $0x8] sm:$0xff] %v24
    // Predicated region
    $region10: #{tpu_custom_call.1} parent=1 // pred_check
      _
    $region11: #{tpu_custom_call.1} parent=1 // pred_check_branch
      %28 = sbr.rel (0) target = $region13
    $region12: #{tpu_custom_call.1} parent=1 // pred_region
      %s30 = ssub.s32 256, 256
      %31 = vsyncadd [#allocation4], %s30
      %s33 = sshll.u32 [#allocation5], 4
      %s34 = int_to_ptr.vmem [resolvable:$true] %s33
      %36 = dma.vmem_to_hbm [thread:$0]  %s34, 256, %s1, [#allocation4]
    $region13: #{tpu_custom_call.1} parent=1 // pred_fallthru
      _
    // Predicated region
    $region14: #{tpu_custom_call.1} parent=1 // pred_check
      _
    $region15: #{tpu_custom_call.1} parent=1 // pred_check_branch
      %38 = sbr.rel (0) target = $region17
    $region16: #{tpu_custom_call.1} parent=1 // pred_region
      %39 = dma.done [#allocation4], 256
    $region17: #{tpu_custom_call.1} parent=1 // pred_fallthru
      _
    %40 = vsyncpa [#allocation3], 1
    %41 = vsyncpa [#allocation4], 1

</llo_original>
